<compile_context>
chip_gen: v7x
topology: tpu7x:2x2x1
jax: 0.10.0
libtpu: 0.0.40
codegen_flags: <defaults>
</compile_context>

<pallas_src>
import functools
import math

import jax
import jax.numpy as jnp
from jax.experimental import pallas as pl
from jax.experimental.pallas import tpu as pltpu

# Set to jnp.bfloat16 on v6e / v7x for ~2x MXU throughput (accumulation stays
# f32; softmax / LayerNorm math stays f32).  Default f32 = exact parity with
# the PyTorch reference.
MXU_INPUT_DTYPE = None


# ----------------------------------------------------------------------------
# Tiling helper
# ----------------------------------------------------------------------------
def _pick_tile(dim, target, align):
    """Largest block <= target that divides `dim` and is a multiple of
    `align`; falls back to the full dim (always a legal block shape)."""
    if dim <= target:
        return dim
    t = (target // align) * align
    while t >= align:
        if dim % t == 0:
            return t
        t -= align
    return dim


# ----------------------------------------------------------------------------
# Tiled linear (+ bias, optional ReLU)
# ----------------------------------------------------------------------------
def _linear_kernel(x_ref, w_ref, b_ref, o_ref, acc_ref, *, activation,
                   mxu_dtype):
    @pl.when(pl.program_id(2) == 0)
    def _():
        acc_ref[...] = jnp.zeros_like(acc_ref)

    x = x_ref[...]
    w = w_ref[...]
    if mxu_dtype is not None:
        x = x.astype(mxu_dtype)
        w = w.astype(mxu_dtype)
    acc_ref[...] += jnp.dot(x, w, preferred_element_type=jnp.float32)

    @pl.when(pl.program_id(2) == pl.num_programs(2) - 1)
    def _():
        y = acc_ref[...] + b_ref[...].astype(jnp.float32)
        if activation == "relu":
            y = jnp.maximum(y, 0.0)
        o_ref[...] = y.astype(o_ref.dtype)


def linear(x, w, b, activation=None):
    """y = act(x @ w + b), tiled (M, N, K) with a f32 VMEM accumulator."""
    N, K = x.shape
    Dout = w.shape[1]
    tm = _pick_tile(N, 256, 8)
    tn = _pick_tile(Dout, 256, 128)
    tk = _pick_tile(K, 512, 128)
    grid = (N // tm, Dout // tn, K // tk)
    return pl.pallas_call(
        functools.partial(_linear_kernel, activation=activation,
                          mxu_dtype=MXU_INPUT_DTYPE),
        out_shape=jax.ShapeDtypeStruct((N, Dout), x.dtype),
        grid=grid,
        in_specs=[
            pl.BlockSpec((tm, tk), lambda i, j, k: (i, k)),
            pl.BlockSpec((tk, tn), lambda i, j, k: (k, j)),
            pl.BlockSpec((1, tn), lambda i, j, k: (0, j)),
        ],
        out_specs=pl.BlockSpec((tm, tn), lambda i, j, k: (i, j)),
        scratch_shapes=[pltpu.VMEM((tm, tn), jnp.float32)],
        compiler_params=pltpu.CompilerParams(
            dimension_semantics=("parallel", "parallel", "arbitrary")),
    )(x, w, b)


# ----------------------------------------------------------------------------
# Tiled linear with fused (bias + residual-add + LayerNorm) epilogue
# ----------------------------------------------------------------------------
def _linear_res_ln_kernel(x_ref, w_ref, b_ref, res_ref, g_ref, bt_ref,
                          o_ref, acc_ref, *, eps, mxu_dtype):
    k = pl.program_id(1)

    @pl.when(k == 0)
    def _():
        acc_ref[...] = jnp.zeros_like(acc_ref)

    x = x_ref[...]
    w = w_ref[...]
    if mxu_dtype is not None:
        x = x.astype(mxu_dtype)
        w = w.astype(mxu_dtype)
    acc_ref[...] += jnp.dot(x, w, preferred_element_type=jnp.float32)

    @pl.when(k == pl.num_programs(1) - 1)
    def _():
        z = (acc_ref[...] + b_ref[...].astype(jnp.float32)
             + res_ref[...].astype(jnp.float32))
        mu = jnp.mean(z, axis=-1, keepdims=True)
        var = jnp.mean((z - mu) ** 2, axis=-1, keepdims=True)
        zn = (z - mu) * jax.lax.rsqrt(var + eps)
        y = zn * g_ref[...].astype(jnp.float32) + bt_ref[...].astype(jnp.float32)
        o_ref[...] = y.astype(o_ref.dtype)


def linear_residual_layernorm(x, w, b, residual, gamma, beta, eps=1e-5):
    """LayerNorm(residual + x @ w + b) — matmul with fused add+LN epilogue."""
    N, K = x.shape
    D = w.shape[1]          # == d_model; kept whole for LayerNorm row stats
    tm = _pick_tile(N, 256, 8)
    tk = _pick_tile(K, 512, 128)
    grid = (N // tm, K // tk)
    return pl.pallas_call(
        functools.partial(_linear_res_ln_kernel, eps=eps,
                          mxu_dtype=MXU_INPUT_DTYPE),
        out_shape=jax.ShapeDtypeStruct((N, D), residual.dtype),
        grid=grid,
        in_specs=[
            pl.BlockSpec((tm, tk), lambda i, k: (i, k)),
            pl.BlockSpec((tk, D), lambda i, k: (k, 0)),
            pl.BlockSpec((1, D), lambda i, k: (0, 0)),
            pl.BlockSpec((tm, D), lambda i, k: (i, 0)),
            pl.BlockSpec((1, D), lambda i, k: (0, 0)),
            pl.BlockSpec((1, D), lambda i, k: (0, 0)),
        ],
        out_specs=pl.BlockSpec((tm, D), lambda i, k: (i, 0)),
        scratch_shapes=[pltpu.VMEM((tm, D), jnp.float32)],
        compiler_params=pltpu.CompilerParams(
            dimension_semantics=("parallel", "arbitrary")),
    )(x, w, b, residual, gamma, beta)


# ----------------------------------------------------------------------------
# Flash-style multi-head attention (lane-dense [B, Sq, D] output)
# ----------------------------------------------------------------------------
def _mha_kernel(q_ref, k_ref, v_ref, m_ref, o_ref,
                m_scr, l_scr, acc_scr, *, inv_scale, num_heads, mxu_dtype):
    kv_idx = pl.program_id(2)

    @pl.when(kv_idx == 0)
    def _():
        m_scr[...] = jnp.full(m_scr.shape, -jnp.inf, jnp.float32)
        l_scr[...] = jnp.zeros(l_scr.shape, jnp.float32)
        acc_scr[...] = jnp.zeros(acc_scr.shape, jnp.float32)

    mask = m_ref[0, 0]                                    # (tq, tk); 1=keep, 0=mask

    for h in range(num_heads):                            # static unroll over heads
        qh = q_ref[0, h]                                  # (tq, dk)
        kh = k_ref[0, h]                                  # (tk, dk)
        vh = v_ref[0, h]                                  # (tk, dk)
        if mxu_dtype is not None:
            qh = qh.astype(mxu_dtype)
            kh = kh.astype(mxu_dtype)
        s = jax.lax.dot_general(qh, kh, (((1,), (1,)), ((), ())),
                                preferred_element_type=jnp.float32)
        s = s * inv_scale                                 # (tq, tk)
        s = jnp.where(mask == 0, jnp.float32(-1000000000.0), s)

        m_prev = m_scr[h]                                 # (tq, 1)
        m_new = jnp.maximum(m_prev, jnp.max(s, axis=-1, keepdims=True))
        alpha = jnp.exp(m_prev - m_new)
        p = jnp.exp(s - m_new)                            # (tq, tk)
        l_scr[h] = alpha * l_scr[h] + jnp.sum(p, axis=-1, keepdims=True)
        pv = p if mxu_dtype is None else p.astype(mxu_dtype)
        vv = vh if mxu_dtype is None else vh.astype(mxu_dtype)
        acc_scr[h] = alpha * acc_scr[h] + jnp.dot(
            pv, vv, preferred_element_type=jnp.float32)
        m_scr[h] = m_new

    @pl.when(kv_idx == pl.num_programs(2) - 1)
    def _():
        outs = [(acc_scr[h] / l_scr[h]).astype(o_ref.dtype)
                for h in range(num_heads)]
        # heads concatenated along lanes -> (tq, H*dk) == (tq, d_model)
        o_ref[0] = jnp.concatenate(outs, axis=-1)


def attention(q, k, v, mask, inv_scale):
    """q/k/v: [B,H,S,dk]; mask: [B,1,Sq,Sk] (1=keep).  Out: [B, Sq, H*dk]."""
    B, H, Sq, dk = q.shape
    Sk = k.shape[2]
    D = H * dk
    tq = _pick_tile(Sq, 256, 8)
    tk = _pick_tile(Sk, 512, 128)
    grid = (B, Sq // tq, Sk // tk)
    return pl.pallas_call(
        functools.partial(_mha_kernel, inv_scale=inv_scale, num_heads=H,
                          mxu_dtype=MXU_INPUT_DTYPE),
        out_shape=jax.ShapeDtypeStruct((B, Sq, D), q.dtype),
        grid=grid,
        in_specs=[
            pl.BlockSpec((1, H, tq, dk), lambda b, qi, ki: (b, 0, qi, 0)),
            pl.BlockSpec((1, H, tk, dk), lambda b, qi, ki: (b, 0, ki, 0)),
            pl.BlockSpec((1, H, tk, dk), lambda b, qi, ki: (b, 0, ki, 0)),
            pl.BlockSpec((1, 1, tq, tk), lambda b, qi, ki: (b, 0, qi, ki)),
        ],
        out_specs=pl.BlockSpec((1, tq, D), lambda b, qi, ki: (b, qi, 0)),
        scratch_shapes=[
            pltpu.VMEM((H, tq, 1), jnp.float32),    # running max
            pltpu.VMEM((H, tq, 1), jnp.float32),    # running denominator
            pltpu.VMEM((H, tq, dk), jnp.float32),   # running numerator
        ],
        compiler_params=pltpu.CompilerParams(
            dimension_semantics=("parallel", "parallel", "arbitrary")),
    )(q, k, v, mask)


# ----------------------------------------------------------------------------
# Module-level glue (reshapes / parameter plumbing only)
# ----------------------------------------------------------------------------
def _split_heads(x2d, B, S, H, dk):
    # [B*S, D] -> [B, H, S, dk]
    return x2d.reshape(B, S, H, dk).transpose(0, 2, 1, 3)


def multi_head_attention(q_src, kv_src, mask, p, num_heads):
    """Returns the attention context as a lane-dense [B*Sq, d_model] slab.
    (The output projection + residual + LayerNorm are fused downstream.)"""
    B, Sq, D = q_src.shape
    Sk = kv_src.shape[1]
    dk = D // num_heads
    inv_scale = 1.0 / math.sqrt(dk)

    q2 = q_src.reshape(B * Sq, D)
    if q_src is kv_src:
        # self-attention: fused QKV projection -> x read from HBM once.
        wqkv = jnp.concatenate([p["wq"], p["wk"], p["wv"]], axis=1)
        bqkv = jnp.concatenate([p["bq"], p["bk"], p["bv"]], axis=1)
        qkv = linear(q2, wqkv, bqkv)                         # [N, 3D]
        q_p, k_p, v_p = qkv[:, :D], qkv[:, D:2 * D], qkv[:, 2 * D:]
    else:
        # enc-dec attention: fused KV projection on the encoder output.
        kv2 = kv_src.reshape(B * Sk, D)
        q_p = linear(q2, p["wq"], p["bq"])
        wkv = jnp.concatenate([p["wk"], p["wv"]], axis=1)
        bkv = jnp.concatenate([p["bk"], p["bv"]], axis=1)
        kv = linear(kv2, wkv, bkv)                           # [M, 2D]
        k_p, v_p = kv[:, :D], kv[:, D:]

    q4 = _split_heads(q_p, B, Sq, num_heads, dk)
    k4 = _split_heads(k_p, B, Sk, num_heads, dk)
    v4 = _split_heads(v_p, B, Sk, num_heads, dk)

    # Mask kept at [B, 1, Sq, Sk] — NOT broadcast over heads on the host.
    if mask is None:
        mask4 = jnp.ones((B, 1, Sq, Sk), jnp.float32)
    else:
        mask4 = jnp.broadcast_to(mask.astype(jnp.float32), (B, 1, Sq, Sk))

    ctx = attention(q4, k4, v4, mask4, inv_scale)            # [B, Sq, D]
    return ctx.reshape(B * Sq, D)


def decoder_layer(x, enc_output, params, num_heads,
                  src_mask=None, tgt_mask=None):
    B, S, D = x.shape
    x2 = x.reshape(B * S, D)

    # 1) masked self-attention  ->  W_o + residual + LayerNorm fused epilogue
    pa = params["self_attn"]
    ctx = multi_head_attention(x, x, tgt_mask, pa, num_heads)
    x2 = linear_residual_layernorm(ctx, pa["wo"], pa["bo"], x2,
                                   params["norm1_g"], params["norm1_b"])

    # 2) encoder-decoder attention -> W_o + residual + LayerNorm fused epilogue
    pb = params["enc_dec_attn"]
    x3 = x2.reshape(B, S, D)
    ctx = multi_head_attention(x3, enc_output, src_mask, pb, num_heads)
    x2 = linear_residual_layernorm(ctx, pb["wo"], pb["bo"], x2,
                                   params["norm2_g"], params["norm2_b"])

    # 3) FFN: w1+ReLU kernel, then w2 + residual + LayerNorm fused epilogue
    pf = params["ffn"]
    h = linear(x2, pf["w1"], pf["b1"], activation="relu")
    x2 = linear_residual_layernorm(h, pf["w2"], pf["b2"], x2,
                                   params["norm3_g"], params["norm3_b"])
    return x2.reshape(B, S, D)


# ----------------------------------------------------------------------------
# Deterministic parameter init (shapes from DecoderLayer.__init__)
# ----------------------------------------------------------------------------
def init_linear(key, d_in, d_out):
    kw, kb = jax.random.split(key)
    w = jax.random.normal(kw, (d_in, d_out), jnp.float32) / jnp.sqrt(d_in)
    b = jax.random.normal(kb, (1, d_out), jnp.float32) * 0.01
    return w, b


def init_mha(key, d_model):
    ks = jax.random.split(key, 4)
    wq, bq = init_linear(ks[0], d_model, d_model)
    wk, bk = init_linear(ks[1], d_model, d_model)
    wv, bv = init_linear(ks[2], d_model, d_model)
    wo, bo = init_linear(ks[3], d_model, d_model)
    return dict(wq=wq, bq=bq, wk=wk, bk=bk, wv=wv, bv=bv, wo=wo, bo=bo)


def init_decoder_layer(key, d_model, d_ff):
    ks = jax.random.split(key, 4)
    w1, b1 = init_linear(ks[2], d_model, d_ff)
    w2, b2 = init_linear(ks[3], d_ff, d_model)
    return dict(
        self_attn=init_mha(ks[0], d_model),
        enc_dec_attn=init_mha(ks[1], d_model),
        ffn=dict(w1=w1, b1=b1, w2=w2, b2=b2),
        norm1_g=jnp.ones((1, d_model), jnp.float32),
        norm1_b=jnp.zeros((1, d_model), jnp.float32),
        norm2_g=jnp.ones((1, d_model), jnp.float32),
        norm2_b=jnp.zeros((1, d_model), jnp.float32),
        norm3_g=jnp.ones((1, d_model), jnp.float32),
        norm3_b=jnp.zeros((1, d_model), jnp.float32),
    )


if __name__ == "__main__":
    B, S, D, H, DFF = 2, 8, 32, 4, 64

    key = jax.random.PRNGKey(0)
    kx, ke, kp = jax.random.split(key, 3)
    x = jax.random.normal(kx, (B, S, D), jnp.float32)
    enc_output = jax.random.normal(ke, (B, S, D), jnp.float32)
    params = init_decoder_layer(kp, D, DFF)

    # causal mask for self-attn [B,1,S,S]; all-ones src mask [B,1,1,S]
    tgt_mask = jnp.tril(jnp.ones((S, S), jnp.float32))[None, None]
    tgt_mask = jnp.broadcast_to(tgt_mask, (B, 1, S, S))
    src_mask = jnp.ones((B, 1, 1, S), jnp.float32)

    out = decoder_layer(x, enc_output, params, H,
                        src_mask=src_mask, tgt_mask=tgt_mask)
    out = jax.block_until_ready(out)
    assert out.shape == (B, S, D)
    assert bool(jnp.all(jnp.isfinite(out)))
    print("KERNEL_OK")
</pallas_src>

<mosaic_0001>
module attributes {stable_mosaic.version = 11 : i64} {
  func.func @_linear_kernel(%arg0: i32, %arg1: i32, %arg2: i32, %arg3: memref<16x32xf32, #tpu.memory_space<vmem>>, %arg4: memref<32x96xf32, #tpu.memory_space<vmem>>, %arg5: memref<1x96xf32, #tpu.memory_space<vmem>>, %arg6: memref<16x96xf32, #tpu.memory_space<vmem>>, %arg7: memref<16x96xf32, #tpu.memory_space<vmem>>) attributes {dimension_semantics = [#tpu.dimension_semantics<parallel>, #tpu.dimension_semantics<parallel>, #tpu.dimension_semantics<arbitrary>], iteration_bounds = array<i64: 1, 1, 1>, scalar_prefetch = 0 : i64, scratch_operands = 1 : i64, tpu.core_type = #tpu.core_type<tc>, window_params = [{transform_indices = @transform_0, window_bounds = array<i64: 16, 32>}, {transform_indices = @transform_1, window_bounds = array<i64: 32, 96>}, {transform_indices = @transform_2, window_bounds = array<i64: 1, 96>}, {transform_indices = @transform_3, window_bounds = array<i64: 16, 96>}]} {
    %c0_i32 = arith.constant 0 : i32
    %0 = arith.cmpi eq, %arg2, %c0_i32 : i32
    %1 = arith.extui %0 : i1 to i32
    %c0_i32_0 = arith.constant 0 : i32
    %2 = arith.cmpi ne, %1, %c0_i32_0 : i32
    scf.if %2 {
      %cst_10 = arith.constant 0.000000e+00 : f32
      %12 = vector.broadcast %cst_10 : f32 to vector<16x96xf32>
      %c0_11 = arith.constant 0 : index
      %c0_12 = arith.constant 0 : index
      %13 = vector.load %arg7[%c0_11, %c0_12] : memref<16x96xf32, #tpu.memory_space<vmem>>, vector<16x96xf32>
      tpu.vector_store %arg7[%c0_11, %c0_12], %12 {strides = array<i32>} : memref<16x96xf32, #tpu.memory_space<vmem>>, vector<16x96xf32>,
    } else {
    }
    %c0 = arith.constant 0 : index
    %c0_1 = arith.constant 0 : index
    %3 = vector.load %arg3[%c0, %c0_1] : memref<16x32xf32, #tpu.memory_space<vmem>>, vector<16x32xf32>
    %c0_2 = arith.constant 0 : index
    %c0_3 = arith.constant 0 : index
    %4 = vector.load %arg4[%c0_2, %c0_3] : memref<32x96xf32, #tpu.memory_space<vmem>>, vector<32x96xf32>
    %c0_4 = arith.constant 0 : index
    %c0_5 = arith.constant 0 : index
    %5 = vector.load %arg7[%c0_4, %c0_5] : memref<16x96xf32, #tpu.memory_space<vmem>>, vector<16x96xf32>
    %cst = arith.constant dense<0.000000e+00> : vector<16x96xf32>
    %6 = tpu.matmul %3, %4, %cst {dimension_numbers = #tpu.dot_dimension_numbers<[1], [0], [0], [1], [0, 0, 1, 1], [], []>} : vector<16x32xf32>, vector<32x96xf32>, vector<16x96xf32> -> vector<16x96xf32>
    %7 = arith.addf %5, %6 : vector<16x96xf32>
    %c0_6 = arith.constant 0 : index
    %c0_7 = arith.constant 0 : index
    %8 = vector.load %arg7[%c0_6, %c0_7] : memref<16x96xf32, #tpu.memory_space<vmem>>, vector<16x96xf32>
    tpu.vector_store %arg7[%c0_6, %c0_7], %7 {strides = array<i32>} : memref<16x96xf32, #tpu.memory_space<vmem>>, vector<16x96xf32>,
    %c0_i32_8 = arith.constant 0 : i32
    %9 = arith.cmpi eq, %arg2, %c0_i32_8 : i32
    %10 = arith.extui %9 : i1 to i32
    %c0_i32_9 = arith.constant 0 : i32
    %11 = arith.cmpi ne, %10, %c0_i32_9 : i32
    scf.if %11 {
      %c0_10 = arith.constant 0 : index
      %c0_11 = arith.constant 0 : index
      %12 = vector.load %arg7[%c0_10, %c0_11] : memref<16x96xf32, #tpu.memory_space<vmem>>, vector<16x96xf32>
      %c0_12 = arith.constant 0 : index
      %c0_13 = arith.constant 0 : index
      %13 = vector.load %arg5[%c0_12, %c0_13] : memref<1x96xf32, #tpu.memory_space<vmem>>, vector<1x96xf32>
      %14 = vector.broadcast %13 : vector<1x96xf32> to vector<16x96xf32>
      %15 = arith.addf %12, %14 : vector<16x96xf32>
      %c0_14 = arith.constant 0 : index
      %c0_15 = arith.constant 0 : index
      %16 = vector.load %arg6[%c0_14, %c0_15] : memref<16x96xf32, #tpu.memory_space<vmem>>, vector<16x96xf32>
      tpu.vector_store %arg6[%c0_14, %c0_15], %15 {strides = array<i32>} : memref<16x96xf32, #tpu.memory_space<vmem>>, vector<16x96xf32>,
    } else {
    }
    return
  }
  func.func @transform_0(%arg0: i32, %arg1: i32, %arg2: i32) -> (i32, i32) {
    %c0_i32 = arith.constant 0 : i32
    return %arg0, %arg2 : i32, i32
  }
  func.func @transform_1(%arg0: i32, %arg1: i32, %arg2: i32) -> (i32, i32) {
    %c0_i32 = arith.constant 0 : i32
    return %arg2, %arg1 : i32, i32
  }
  func.func @transform_2(%arg0: i32, %arg1: i32, %arg2: i32) -> (i32, i32) {
    %c0_i32 = arith.constant 0 : i32
    %c0_i32_0 = arith.constant 0 : i32
    return %c0_i32, %arg1 : i32, i32
  }
  func.func @transform_3(%arg0: i32, %arg1: i32, %arg2: i32) -> (i32, i32) {
    %c0_i32 = arith.constant 0 : i32
    return %arg0, %arg1 : i32, i32
  }
}

</mosaic_0001>

<llo_original>
// kernel: tpu_custom_call.1
$region0: #{tpu_custom_call.1}
  #allocation0 [shape = 'u32[]', space=smem, size = 0x4, offset = 0x4, fixed_abs, tag = 'smem constant byte address 0x4 - core index']
  #allocation1 [shape = 'u32[144,128]{1,0:T(1,128)}', space=vmem, size = 0x12000, scoped, tag = 'internal scratch']
  #allocation2 [shape = 'f32[16,96]{1,0:T(8,128)}', space=vmem, size = 0x2000, scoped, tag = 'scratch operand']
  %s0 = inlined_call_operand.hbm [shape: f32[16,32], index: 0, kind: input, shape index: {}]
  %s1 = inlined_call_operand.hbm [shape: f32[32,96], index: 1, kind: input, shape index: {}]
  %s2 = inlined_call_operand.vmem [shape: f32[1,96], index: 2, kind: input, shape index: {}]
  %s3 = inlined_call_operand.hbm [shape: f32[16,96], index: 3, kind: output, shape index: {}]
  %s4 = sld [smem:[#allocation0]]
  $region38: #{tpu_custom_call.1} parent=0
    _
  %s6 = ssub.s32 1, %s4
  %s7 = scalar_select 0, %s6, %s4
  $region1: #{tpu_custom_call.1} parent=0
    #allocation3 [shape = 'u8[8192]{0}', space=vmem, size = 0x2000, scoped, tag = 'input window, operand 0, single buffered']
    #allocation4 [shape = 's32[1]{0}', space=sflag, size = 0x4, scoped, tag = 'scoped memory for tpu_custom_call.1']
    #allocation5 [shape = 's32[1]{0}', space=sflag, size = 0x4, scoped, tag = 'scoped memory for tpu_custom_call.1']
    #allocation6 [shape = 'u8[16384]{0}', space=vmem, size = 0x4000, scoped, tag = 'input window, operand 1, single buffered']
    #allocation7 [shape = 's32[1]{0}', space=sflag, size = 0x4, scoped, tag = 'scoped memory for tpu_custom_call.1']
    #allocation8 [shape = 'u8[8192]{0}', space=vmem, size = 0x2000, scoped, tag = 'output window, operand 0, single buffered']
    %8 = vsyncpa [#allocation4], 0
    %9 = vsyncpa [#allocation7], 0
    %10 = vsyncpa [#allocation5], 0
    // Predicated region
    $region2: #{tpu_custom_call.1} parent=1 // pred_check
      _
    $region3: #{tpu_custom_call.1} parent=1 // pred_check_branch
      %12 = sbr.rel (0) target = $region5
    $region4: #{tpu_custom_call.1} parent=1 // pred_region
      %s14 = ssub.s32 256, 256
      %15 = vsyncadd [#allocation4], %s14
      %s16 = sshll.u32 [#allocation3], 4
      %s17 = int_to_ptr.vmem [resolvable:$true] %s16
      %22 = dma.hbm_to_vmem [thread:$0]  %s0, 256, %s17, [#allocation4], 128, 128, 8
    $region5: #{tpu_custom_call.1} parent=1 // pred_fallthru
      _
    // Predicated region
    $region6: #{tpu_custom_call.1} parent=1 // pred_check
      _
    $region7: #{tpu_custom_call.1} parent=1 // pred_check_branch
      %24 = sbr.rel (0) target = $region9
    $region8: #{tpu_custom_call.1} parent=1 // pred_region
      %s26 = ssub.s32 512, 512
      %27 = vsyncadd [#allocation7], %s26
      %s28 = sshll.u32 [#allocation6], 4
      %s29 = int_to_ptr.vmem [resolvable:$true] %s28
      %34 = dma.hbm_to_vmem [thread:$0]  %s1, 512, %s29, [#allocation7], 128, 128, 8
    $region9: #{tpu_custom_call.1} parent=1 // pred_fallthru
      _
    // Predicated region
    $region10: #{tpu_custom_call.1} parent=1 // pred_check
      _
    $region11: #{tpu_custom_call.1} parent=1 // pred_check_branch
      %36 = sbr.rel (0) target = $region13
    $region12: #{tpu_custom_call.1} parent=1 // pred_region
      _
    $region13: #{tpu_custom_call.1} parent=1 // pred_fallthru
      _
    // Predicated region
    $region14: #{tpu_custom_call.1} parent=1 // pred_check
      _
    $region15: #{tpu_custom_call.1} parent=1 // pred_check_branch
      %38 = sbr.rel (0) target = $region17
    $region16: #{tpu_custom_call.1} parent=1 // pred_region
      %39 = dma.done [#allocation4], 256
    $region17: #{tpu_custom_call.1} parent=1 // pred_fallthru
      _
    // Predicated region
    $region18: #{tpu_custom_call.1} parent=1 // pred_check
      _
    $region19: #{tpu_custom_call.1} parent=1 // pred_check_branch
      %41 = sbr.rel (0) target = $region21
    $region20: #{tpu_custom_call.1} parent=1 // pred_region
      %42 = dma.done [#allocation7], 512
    $region21: #{tpu_custom_call.1} parent=1 // pred_fallthru
      _
    %p43 = scmp.eq.s32.totalorder 0, 0
    // Predicated region
    $region22: #{tpu_custom_call.1} parent=1 // pred_check
      %p44 = pneg %p43
    $region23: #{tpu_custom_call.1} parent=1 // pred_check_branch
      %46 = sbr.rel (%p44) target = $region25
    $region24: #{tpu_custom_call.1} parent=1 // pred_region
      %vm47 = vcmask 785408
      %48 = vst.msk [vmem:[#allocation2] sm:$0xff] %vm47, 0.0
      %49 = vst.msk [vmem:[#allocation2 + $0x8] sm:$0xff] %vm47, 0.0
    $region25: #{tpu_custom_call.1} parent=1 // pred_fallthru
      _
    %v50 = vld [vmem:[#allocation3] sm:$0xff]
    %v51 = vld [vmem:[#allocation3 + $0x8] sm:$0xff]
    %v52 = vld [vmem:[#allocation6] sm:$0xff]
    %v53 = vld [vmem:[#allocation6 + $0x8] sm:$0xff]
    %v54 = vld [vmem:[#allocation6 + $0x10] sm:$0xff]
    %v55 = vld [vmem:[#allocation6 + $0x18] sm:$0xff]
    %v56 = vld [vmem:[#allocation2] sm:$0xff]
    %v57 = vld [vmem:[#allocation2 + $0x8] sm:$0xff]
    %vm58 = vcmask 261120
    %v60 = vsel %vm58, %v50, 0
    %v63 = vsel %vm58, %v51, 0
    %65 = vmatprep.subr.mxu0 0.0
    %66 = vmatpush1.msra.mxu0 %v52
    %67 = vmatprep.subr.mxu0 0.0
    %68 = vmatpush1.msra.mxu0 %v53
    %69 = vmatprep.subr.mxu0 0.0
    %70 = vmatpush1.msra.mxu0 %v54
    %71 = vmatprep.subr.mxu0 0.0
    %72 = vmatpush1.msra.mxu0 %v55
    %73 = vmatprep.subr.mxu0 0.0
    %74 = vmatpush1.msra.mxu0 0.0
    %75 = vmatprep.subr.mxu0 0.0
    %76 = vmatpush1.msra.mxu0 0.0
    %77 = vmatprep.subr.mxu0 0.0
    %78 = vmatpush1.msra.mxu0 0.0
    %79 = vmatprep.subr.mxu0 0.0
    %80 = vmatpush1.msra.mxu0 0.0
    %81 = vmatprep.subr.mxu0 0.0
    %82 = vmatpush1.msra.mxu0 0.0
    %83 = vmatprep.subr.mxu0 0.0
    %84 = vmatpush1.msra.mxu0 0.0
    %85 = vmatprep.subr.mxu0 0.0
    %86 = vmatpush1.msra.mxu0 0.0
    %87 = vmatprep.subr.mxu0 0.0
    %88 = vmatpush1.msra.mxu0 0.0
    %89 = vmatprep.subr.mxu0 0.0
    %90 = vmatpush1.msra.mxu0 0.0
    %91 = vmatprep.subr.mxu0 0.0
    %92 = vmatpush1.msra.mxu0 0.0
    %93 = vmatprep.subr.mxu0 0.0
    %94 = vmatpush1.msra.mxu0 0.0
    %95 = vmatprep.subr.mxu0 0.0
    %96 = vmatpush1.msra.mxu0 0.0
    %97 = vmatprep.subr.mxu0 0.0
    %98 = vmatpush1.msra.mxu0 0.0
    %99 = vmatprep.subr.mxu0 0.0
    %100 = vmatpush1.msra.mxu0 0.0
    %101 = vmatprep.subr.mxu0 0.0
    %102 = vmatpush1.msra.mxu0 0.0
    %103 = vmatprep.subr.mxu0 0.0
    %104 = vmatpush1.msra.mxu0 0.0
    %105 = vmatprep.subr.mxu0 0.0
    %106 = vmatpush1.msra.mxu0 0.0
    %107 = vmatprep.subr.mxu0 0.0
    %108 = vmatpush1.msra.mxu0 0.0
    %109 = vmatprep.subr.mxu0 0.0
    %110 = vmatpush1.msra.mxu0 0.0
    %111 = vmatprep.subr.mxu0 0.0
    %112 = vmatpush1.msra.mxu0 0.0
    %113 = vmatprep.subr.mxu0 0.0
    %114 = vmatpush1.msra.mxu0 0.0
    %115 = vmatprep.subr.mxu0 0.0
    %116 = vmatpush1.msra.mxu0 0.0
    %117 = vmatprep.subr.mxu0 0.0
    %118 = vmatpush1.msra.mxu0 0.0
    %119 = vmatprep.subr.mxu0 0.0
    %120 = vmatpush1.msra.mxu0 0.0
    %121 = vmatprep.subr.mxu0 0.0
    %122 = vmatpush1.msra.mxu0 0.0
    %123 = vmatprep.subr.mxu0 0.0
    %124 = vmatpush1.msra.mxu0 0.0
    %125 = vmatprep.subr.mxu0 0.0
    %126 = vmatpush1.msra.mxu0 0.0
    %127 = vmatprep.subr.mxu0 0.0
    %128 = vmatpush1.msra.mxu0 0.0
    %129 = vmatprep.mubr.f32.mxu0 0.0
    %130 = vmatmul.mubr.f32.gmra.mrb[0].mxu0 %v60
    %v131 = vpop.f32.mrb[0].mxu0
    %v132 = vadd.f32 0.0, %v131
    %v133 = vpop.f32.mrb[0].mxu0
    %134 = vmatprep.mubr.f32.mxu0 0.0
    %135 = vmatmul.mubr.f32.gmra.mrb[0].mxu0 %v63
    %v136 = vpop.f32.mrb[0].mxu0
    %v137 = vadd.f32 0.0, %v136
    %v138 = vpop.f32.mrb[0].mxu0
    %139 = vdwg.mxu0
    %v140 = vadd.f32 %v56, %v132
    %v141 = vadd.f32 %v57, %v137
    %vm142 = vcmask 785408
    %143 = vst.msk [vmem:[#allocation2] sm:$0xff] %vm142, %v140
    %144 = vst.msk [vmem:[#allocation2 + $0x8] sm:$0xff] %vm142, %v141
    // Predicated region
    $region26: #{tpu_custom_call.1} parent=1 // pred_check
      %p145 = pneg %p43
    $region27: #{tpu_custom_call.1} parent=1 // pred_check_branch
      %147 = sbr.rel (%p145) target = $region29
    $region28: #{tpu_custom_call.1} parent=1 // pred_region
      %v148 = vld [vmem:[#allocation2] sm:$0xff]
      %v149 = vld [vmem:[#allocation2 + $0x8] sm:$0xff]
      %v150 = vld [vmem:[%s2] sm:$0x1]
      %v152 = vlaneseq
      %v153 = vshrl.u32 %v152, 7
      %v154 = vsub.s32 0, %v153
      %v155 = vrot.slane %v150, %v154
      %v157 = vadd.f32 %v148, %v155
      %v158 = vadd.f32 %v149, %v155
      %159 = vst.msk [vmem:[#allocation8] sm:$0xff] %vm142, %v157
      %160 = vst.msk [vmem:[#allocation8 + $0x8] sm:$0xff] %vm142, %v158
    $region29: #{tpu_custom_call.1} parent=1 // pred_fallthru
      _
    // Predicated region
    $region30: #{tpu_custom_call.1} parent=1 // pred_check
      _
    $region31: #{tpu_custom_call.1} parent=1 // pred_check_branch
      %162 = sbr.rel (0) target = $region33
    $region32: #{tpu_custom_call.1} parent=1 // pred_region
      %s164 = ssub.s32 256, 256
      %165 = vsyncadd [#allocation5], %s164
      %s166 = sshll.u32 [#allocation8], 4
      %s167 = int_to_ptr.vmem [resolvable:$true] %s166
      %172 = dma.vmem_to_hbm [thread:$0]  %s167, 256, %s3, [#allocation5], 128, 128, 8
    $region33: #{tpu_custom_call.1} parent=1 // pred_fallthru
      _
    // Predicated region
    $region34: #{tpu_custom_call.1} parent=1 // pred_check
      _
    $region35: #{tpu_custom_call.1} parent=1 // pred_check_branch
      %174 = sbr.rel (0) target = $region37
    $region36: #{tpu_custom_call.1} parent=1 // pred_region
      %175 = dma.done [#allocation5], 256
    $region37: #{tpu_custom_call.1} parent=1 // pred_fallthru
      _
    %176 = vsyncpa [#allocation4], 1
    %177 = vsyncpa [#allocation7], 1
    %178 = vsyncpa [#allocation5], 1

</llo_original>
